<compile_context>
chip_gen: v5e
topology: v5e:2x2
jax: 0.10.0
libtpu: 0.0.40
codegen_flags: <defaults>
</compile_context>

<pallas_src>
import math
import functools

import jax
import jax.numpy as jnp
from jax.experimental import pallas as pl
from jax.experimental.pallas import tpu as pltpu


def _level_params(H, W, level):
    """kernel/stride/padding/output size for one SPP level (PyTorch formulas)."""
    kh = math.ceil(H / level)
    kw = math.ceil(W / level)
    sh, sw = kh, kw
    ph = math.floor((kh * level - H + 1) / 2)
    pw = math.floor((kw * level - W + 1) / 2)
    OH = (H + 2 * ph - kh) // sh + 1
    OW = (W + 2 * pw - kw) // sw + 1
    return kh, kw, sh, sw, ph, pw, OH, OW


def _choose_channel_tile(C, H, W, S, in_itemsize, needs_f32_scratch,
                         budget_bytes=8 << 20):
    """Channel tile: full C, or a 128-multiple dividing C, sized for VMEM."""
    if C % 128 != 0:
        return C  # block last-dim must be 128-aligned or the full array dim
    per_chan = 2 * (H * W + S) * in_itemsize          # double-buffered in + out
    if needs_f32_scratch:
        per_chan += H * W * 4                          # one f32 scratch copy
    for tc in (512, 384, 256, 128):
        if C % tc == 0 and tc * per_chan <= budget_bytes:
            return tc
    return 128


def _iter_windows(H, W, level_specs):
    """Yield (row, h0, h1, w0, w1, inv_area) for every window of every level."""
    row = 0
    for (kh, kw, sh, sw, ph, pw, OH, OW) in level_specs:
        inv_area = 1.0 / float(kh * kw)
        for oh in range(OH):
            h0 = oh * sh - ph
            h0c, h1c = max(h0, 0), min(h0 + kh, H)
            for ow in range(OW):
                w0 = ow * sw - pw
                w0c, w1c = max(w0, 0), min(w0 + kw, W)
                yield row, h0c, h1c, w0c, w1c, inv_area
                row += 1


def _make_spp_kernel(H, W, level_specs, pool_type, cast_to_f32):
    """Kernel pooling one (H, W, TC) block into a lane-dense (S, TC) block."""
    windows = list(_iter_windows(H, W, level_specs))

    if pool_type == "max_pool":
        # Max over the clipped window is exact (padding would contribute -inf).
        def kernel(x_ref, o_ref):
            for row, h0, h1, w0, w1, _ in windows:
                win = x_ref[h0:h1, w0:w1, :]                         # (wh, ww, TC)
                v = jnp.max(jnp.max(win, axis=0), axis=0, keepdims=True)  # (1, TC)
                o_ref[row:row + 1, :] = v
        return kernel

    # avg_pool: PyTorch default count_include_pad=True -> divide clipped-window
    # sum by the full kernel area (padded zeros add 0 to the sum).
    if cast_to_f32:
        def kernel(x_ref, o_ref, xf_ref):
            xf_ref[...] = x_ref[...].astype(jnp.float32)             # cast tile once
            for row, h0, h1, w0, w1, inv_area in windows:
                win = xf_ref[h0:h1, w0:w1, :]
                s = jnp.sum(jnp.sum(win, axis=0), axis=0, keepdims=True) * inv_area
                o_ref[row:row + 1, :] = s.astype(o_ref.dtype)
        return kernel

    def kernel(x_ref, o_ref):
        for row, h0, h1, w0, w1, inv_area in windows:
            win = x_ref[h0:h1, w0:w1, :]
            s = jnp.sum(jnp.sum(win, axis=0), axis=0, keepdims=True) * inv_area
            o_ref[row:row + 1, :] = s.astype(o_ref.dtype)
    return kernel


@functools.partial(jax.jit, static_argnames=("num_levels", "pool_type"))
def spp_layer(x, num_levels, pool_type="max_pool"):
    """JAX/Pallas equivalent of SPPLayer.forward. x: (N, C, H, W) -> (N, C*sum(l^2))."""
    N, C, H, W = x.shape
    level_specs = [_level_params(H, W, i + 1) for i in range(num_levels)]
    sizes = [spec[6] * spec[7] for spec in level_specs]     # OH*OW per level
    S = sum(sizes)

    cast_to_f32 = (pool_type != "max_pool") and (x.dtype != jnp.float32)
    itemsize = jnp.dtype(x.dtype).itemsize
    TC = _choose_channel_tile(C, H, W, S, itemsize, cast_to_f32)

    # Put channels on the lane (last) axis; single HBM pass over x in the kernel.
    x_nhwc = jnp.transpose(x, (0, 2, 3, 1))                 # (N, H, W, C)

    scratch_shapes = []
    if cast_to_f32:
        scratch_shapes.append(pltpu.VMEM((H, W, TC), jnp.float32))

    pooled = pl.pallas_call(
        _make_spp_kernel(H, W, level_specs, pool_type, cast_to_f32),
        out_shape=jax.ShapeDtypeStruct((N, S, C), x.dtype),
        grid=(N, C // TC),
        in_specs=[pl.BlockSpec((None, H, W, TC), lambda n, c: (n, 0, 0, c))],
        out_specs=pl.BlockSpec((None, S, TC), lambda n, c: (n, 0, c)),
        scratch_shapes=scratch_shapes,
        compiler_params=pltpu.CompilerParams(
            dimension_semantics=("parallel", "parallel")),
    )(x_nhwc)                                               # (N, S, C)

    # Reorder to PyTorch's flatten order: per level (N, OH*OW, C) -> (N, C*OH*OW),
    # then concatenate levels (matches pooled.view(num, -1) + torch.cat).
    flats, off = [], 0
    for sz in sizes:
        blk = pooled[:, off:off + sz, :]
        flats.append(jnp.transpose(blk, (0, 2, 1)).reshape(N, C * sz))
        off += sz
    return jnp.concatenate(flats, axis=1)


def _reference_spp(x, num_levels, pool_type="max_pool"):
    """Pure-JAX reference using lax.reduce_window (mirrors PyTorch pooling)."""
    N, C, H, W = x.shape
    flats = []
    for i in range(num_levels):
        level = i + 1
        kh, kw, sh, sw, ph, pw, OH, OW = _level_params(H, W, level)
        if pool_type == "max_pool":
            pooled = jax.lax.reduce_window(
                x, -jnp.inf, jax.lax.max,
                window_dimensions=(1, 1, kh, kw),
                window_strides=(1, 1, sh, sw),
                padding=[(0, 0), (0, 0), (ph, ph), (pw, pw)],
            )
        else:
            summed = jax.lax.reduce_window(
                x, 0.0, jax.lax.add,
                window_dimensions=(1, 1, kh, kw),
                window_strides=(1, 1, sh, sw),
                padding=[(0, 0), (0, 0), (ph, ph), (pw, pw)],
            )
            pooled = summed / float(kh * kw)
        flats.append(pooled.reshape(N, -1))
    return jnp.concatenate(flats, axis=1)


if __name__ == "__main__":
    key = jax.random.PRNGKey(0)
    N, C, H, W = 2, 4, 16, 16
    num_levels = 3
    x = jax.random.normal(key, (N, C, H, W), dtype=jnp.float32)

    out_max = jax.block_until_ready(spp_layer(x, num_levels=num_levels,
                                              pool_type="max_pool"))
    ref_max = _reference_spp(x, num_levels, "max_pool")
    assert out_max.shape == (N, C * (1 * 1 + 2 * 2 + 3 * 3)), out_max.shape
    assert jnp.allclose(out_max, ref_max, atol=1e-6), "max_pool mismatch vs reference"

    out_avg = jax.block_until_ready(spp_layer(x, num_levels=num_levels,
                                              pool_type="avg_pool"))
    ref_avg = _reference_spp(x, num_levels, "avg_pool")
    assert jnp.allclose(out_avg, ref_avg, atol=1e-5), "avg_pool mismatch vs reference"

    print("KERNEL_OK")
</pallas_src>

<mosaic_0001>
module attributes {stable_mosaic.version = 11 : i64} {
  func.func @kernel(%arg0: i32, %arg1: i32, %arg2: memref<1x16x16x4xf32, #tpu.memory_space<vmem>>, %arg3: memref<1x14x4xf32, #tpu.memory_space<vmem>>) attributes {dimension_semantics = [#tpu.dimension_semantics<parallel>, #tpu.dimension_semantics<parallel>], iteration_bounds = array<i64: 2, 1>, scalar_prefetch = 0 : i64, scratch_operands = 0 : i64, tpu.core_type = #tpu.core_type<tc>, window_params = [{transform_indices = @transform_0, window_bounds = array<i64: 1, 16, 16, 4>}, {transform_indices = @transform_1, window_bounds = array<i64: 1, 14, 4>}]} {
    %c0 = arith.constant 0 : index
    %c0_0 = arith.constant 0 : index
    %c0_1 = arith.constant 0 : index
    %c0_2 = arith.constant 0 : index
    %0 = vector.load %arg2[%c0, %c0_0, %c0_1, %c0_2] : memref<1x16x16x4xf32, #tpu.memory_space<vmem>>, vector<1x16x16x4xf32>
    %1 = vector.shape_cast %0 : vector<1x16x16x4xf32> to vector<16x16x4xf32>
    %cst = arith.constant dense<0xFF800000> : vector<16x4xf32>
    %2 = vector.multi_reduction <maximumf>, %1, %cst [0] : vector<16x16x4xf32> to vector<16x4xf32>
    %cst_3 = arith.constant dense<0xFF800000> : vector<4xf32>
    %3 = vector.multi_reduction <maximumf>, %2, %cst_3 [0] : vector<16x4xf32> to vector<4xf32>
    %4 = vector.shape_cast %3 : vector<4xf32> to vector<1x4xf32>
    %c0_4 = arith.constant 0 : index
    %c0_5 = arith.constant 0 : index
    %c0_6 = arith.constant 0 : index
    %5 = vector.load %arg3[%c0_4, %c0_5, %c0_6] : memref<1x14x4xf32, #tpu.memory_space<vmem>>, vector<1x1x4xf32>
    %6 = vector.shape_cast %5 : vector<1x1x4xf32> to vector<1x4xf32>
    %7 = vector.shape_cast %4 : vector<1x4xf32> to vector<1x1x4xf32>
    tpu.vector_store %arg3[%c0_4, %c0_5, %c0_6], %7 {strides = array<i32>} : memref<1x14x4xf32, #tpu.memory_space<vmem>>, vector<1x1x4xf32>,
    %c0_7 = arith.constant 0 : index
    %c0_8 = arith.constant 0 : index
    %c0_9 = arith.constant 0 : index
    %c0_10 = arith.constant 0 : index
    %8 = vector.load %arg2[%c0_7, %c0_8, %c0_9, %c0_10] : memref<1x16x16x4xf32, #tpu.memory_space<vmem>>, vector<1x8x8x4xf32>
    %9 = vector.shape_cast %8 : vector<1x8x8x4xf32> to vector<8x8x4xf32>
    %cst_11 = arith.constant dense<0xFF800000> : vector<8x4xf32>
    %10 = vector.multi_reduction <maximumf>, %9, %cst_11 [0] : vector<8x8x4xf32> to vector<8x4xf32>
    %cst_12 = arith.constant dense<0xFF800000> : vector<4xf32>
    %11 = vector.multi_reduction <maximumf>, %10, %cst_12 [0] : vector<8x4xf32> to vector<4xf32>
    %12 = vector.shape_cast %11 : vector<4xf32> to vector<1x4xf32>
    %c0_13 = arith.constant 0 : index
    %c1 = arith.constant 1 : index
    %c0_14 = arith.constant 0 : index
    %13 = vector.load %arg3[%c0_13, %c1, %c0_14] : memref<1x14x4xf32, #tpu.memory_space<vmem>>, vector<1x1x4xf32>
    %14 = vector.shape_cast %13 : vector<1x1x4xf32> to vector<1x4xf32>
    %15 = vector.shape_cast %12 : vector<1x4xf32> to vector<1x1x4xf32>
    tpu.vector_store %arg3[%c0_13, %c1, %c0_14], %15 {strides = array<i32>} : memref<1x14x4xf32, #tpu.memory_space<vmem>>, vector<1x1x4xf32>,
    %c0_15 = arith.constant 0 : index
    %c0_16 = arith.constant 0 : index
    %c8 = arith.constant 8 : index
    %c0_17 = arith.constant 0 : index
    %16 = vector.load %arg2[%c0_15, %c0_16, %c8, %c0_17] : memref<1x16x16x4xf32, #tpu.memory_space<vmem>>, vector<1x8x8x4xf32>
    %17 = vector.shape_cast %16 : vector<1x8x8x4xf32> to vector<8x8x4xf32>
    %cst_18 = arith.constant dense<0xFF800000> : vector<8x4xf32>
    %18 = vector.multi_reduction <maximumf>, %17, %cst_18 [0] : vector<8x8x4xf32> to vector<8x4xf32>
    %cst_19 = arith.constant dense<0xFF800000> : vector<4xf32>
    %19 = vector.multi_reduction <maximumf>, %18, %cst_19 [0] : vector<8x4xf32> to vector<4xf32>
    %20 = vector.shape_cast %19 : vector<4xf32> to vector<1x4xf32>
    %c0_20 = arith.constant 0 : index
    %c2 = arith.constant 2 : index
    %c0_21 = arith.constant 0 : index
    %21 = vector.load %arg3[%c0_20, %c2, %c0_21] : memref<1x14x4xf32, #tpu.memory_space<vmem>>, vector<1x1x4xf32>
    %22 = vector.shape_cast %21 : vector<1x1x4xf32> to vector<1x4xf32>
    %23 = vector.shape_cast %20 : vector<1x4xf32> to vector<1x1x4xf32>
    tpu.vector_store %arg3[%c0_20, %c2, %c0_21], %23 {strides = array<i32>} : memref<1x14x4xf32, #tpu.memory_space<vmem>>, vector<1x1x4xf32>,
    %c0_22 = arith.constant 0 : index
    %c8_23 = arith.constant 8 : index
    %c0_24 = arith.constant 0 : index
    %c0_25 = arith.constant 0 : index
    %24 = vector.load %arg2[%c0_22, %c8_23, %c0_24, %c0_25] : memref<1x16x16x4xf32, #tpu.memory_space<vmem>>, vector<1x8x8x4xf32>
    %25 = vector.shape_cast %24 : vector<1x8x8x4xf32> to vector<8x8x4xf32>
    %cst_26 = arith.constant dense<0xFF800000> : vector<8x4xf32>
    %26 = vector.multi_reduction <maximumf>, %25, %cst_26 [0] : vector<8x8x4xf32> to vector<8x4xf32>
    %cst_27 = arith.constant dense<0xFF800000> : vector<4xf32>
    %27 = vector.multi_reduction <maximumf>, %26, %cst_27 [0] : vector<8x4xf32> to vector<4xf32>
    %28 = vector.shape_cast %27 : vector<4xf32> to vector<1x4xf32>
    %c0_28 = arith.constant 0 : index
    %c3 = arith.constant 3 : index
    %c0_29 = arith.constant 0 : index
    %29 = vector.load %arg3[%c0_28, %c3, %c0_29] : memref<1x14x4xf32, #tpu.memory_space<vmem>>, vector<1x1x4xf32>
    %30 = vector.shape_cast %29 : vector<1x1x4xf32> to vector<1x4xf32>
    %31 = vector.shape_cast %28 : vector<1x4xf32> to vector<1x1x4xf32>
    tpu.vector_store %arg3[%c0_28, %c3, %c0_29], %31 {strides = array<i32>} : memref<1x14x4xf32, #tpu.memory_space<vmem>>, vector<1x1x4xf32>,
    %c0_30 = arith.constant 0 : index
    %c8_31 = arith.constant 8 : index
    %c8_32 = arith.constant 8 : index
    %c0_33 = arith.constant 0 : index
    %32 = vector.load %arg2[%c0_30, %c8_31, %c8_32, %c0_33] : memref<1x16x16x4xf32, #tpu.memory_space<vmem>>, vector<1x8x8x4xf32>
    %33 = vector.shape_cast %32 : vector<1x8x8x4xf32> to vector<8x8x4xf32>
    %cst_34 = arith.constant dense<0xFF800000> : vector<8x4xf32>
    %34 = vector.multi_reduction <maximumf>, %33, %cst_34 [0] : vector<8x8x4xf32> to vector<8x4xf32>
    %cst_35 = arith.constant dense<0xFF800000> : vector<4xf32>
    %35 = vector.multi_reduction <maximumf>, %34, %cst_35 [0] : vector<8x4xf32> to vector<4xf32>
    %36 = vector.shape_cast %35 : vector<4xf32> to vector<1x4xf32>
    %c0_36 = arith.constant 0 : index
    %c4 = arith.constant 4 : index
    %c0_37 = arith.constant 0 : index
    %37 = vector.load %arg3[%c0_36, %c4, %c0_37] : memref<1x14x4xf32, #tpu.memory_space<vmem>>, vector<1x1x4xf32>
    %38 = vector.shape_cast %37 : vector<1x1x4xf32> to vector<1x4xf32>
    %39 = vector.shape_cast %36 : vector<1x4xf32> to vector<1x1x4xf32>
    tpu.vector_store %arg3[%c0_36, %c4, %c0_37], %39 {strides = array<i32>} : memref<1x14x4xf32, #tpu.memory_space<vmem>>, vector<1x1x4xf32>,
    %c0_38 = arith.constant 0 : index
    %c0_39 = arith.constant 0 : index
    %c0_40 = arith.constant 0 : index
    %c0_41 = arith.constant 0 : index
    %40 = vector.load %arg2[%c0_38, %c0_39, %c0_40, %c0_41] : memref<1x16x16x4xf32, #tpu.memory_space<vmem>>, vector<1x5x5x4xf32>
    %41 = vector.shape_cast %40 : vector<1x5x5x4xf32> to vector<5x5x4xf32>
    %cst_42 = arith.constant dense<0xFF800000> : vector<5x4xf32>
    %42 = vector.multi_reduction <maximumf>, %41, %cst_42 [0] : vector<5x5x4xf32> to vector<5x4xf32>
    %cst_43 = arith.constant dense<0xFF800000> : vector<4xf32>
    %43 = vector.multi_reduction <maximumf>, %42, %cst_43 [0] : vector<5x4xf32> to vector<4xf32>
    %44 = vector.shape_cast %43 : vector<4xf32> to vector<1x4xf32>
    %c0_44 = arith.constant 0 : index
    %c5 = arith.constant 5 : index
    %c0_45 = arith.constant 0 : index
    %45 = vector.load %arg3[%c0_44, %c5, %c0_45] : memref<1x14x4xf32, #tpu.memory_space<vmem>>, vector<1x1x4xf32>
    %46 = vector.shape_cast %45 : vector<1x1x4xf32> to vector<1x4xf32>
    %47 = vector.shape_cast %44 : vector<1x4xf32> to vector<1x1x4xf32>
    tpu.vector_store %arg3[%c0_44, %c5, %c0_45], %47 {strides = array<i32>} : memref<1x14x4xf32, #tpu.memory_space<vmem>>, vector<1x1x4xf32>,
    %c0_46 = arith.constant 0 : index
    %c0_47 = arith.constant 0 : index
    %c5_48 = arith.constant 5 : index
    %c0_49 = arith.constant 0 : index
    %48 = vector.load %arg2[%c0_46, %c0_47, %c5_48, %c0_49] : memref<1x16x16x4xf32, #tpu.memory_space<vmem>>, vector<1x5x6x4xf32>
    %49 = vector.shape_cast %48 : vector<1x5x6x4xf32> to vector<5x6x4xf32>
    %cst_50 = arith.constant dense<0xFF800000> : vector<6x4xf32>
    %50 = vector.multi_reduction <maximumf>, %49, %cst_50 [0] : vector<5x6x4xf32> to vector<6x4xf32>
    %cst_51 = arith.constant dense<0xFF800000> : vector<4xf32>
    %51 = vector.multi_reduction <maximumf>, %50, %cst_51 [0] : vector<6x4xf32> to vector<4xf32>
    %52 = vector.shape_cast %51 : vector<4xf32> to vector<1x4xf32>
    %c0_52 = arith.constant 0 : index
    %c6 = arith.constant 6 : index
    %c0_53 = arith.constant 0 : index
    %53 = vector.load %arg3[%c0_52, %c6, %c0_53] : memref<1x14x4xf32, #tpu.memory_space<vmem>>, vector<1x1x4xf32>
    %54 = vector.shape_cast %53 : vector<1x1x4xf32> to vector<1x4xf32>
    %55 = vector.shape_cast %52 : vector<1x4xf32> to vector<1x1x4xf32>
    tpu.vector_store %arg3[%c0_52, %c6, %c0_53], %55 {strides = array<i32>} : memref<1x14x4xf32, #tpu.memory_space<vmem>>, vector<1x1x4xf32>,
    %c0_54 = arith.constant 0 : index
    %c0_55 = arith.constant 0 : index
    %c11 = arith.constant 11 : index
    %c0_56 = arith.constant 0 : index
    %56 = vector.load %arg2[%c0_54, %c0_55, %c11, %c0_56] : memref<1x16x16x4xf32, #tpu.memory_space<vmem>>, vector<1x5x5x4xf32>
    %57 = vector.shape_cast %56 : vector<1x5x5x4xf32> to vector<5x5x4xf32>
    %cst_57 = arith.constant dense<0xFF800000> : vector<5x4xf32>
    %58 = vector.multi_reduction <maximumf>, %57, %cst_57 [0] : vector<5x5x4xf32> to vector<5x4xf32>
    %cst_58 = arith.constant dense<0xFF800000> : vector<4xf32>
    %59 = vector.multi_reduction <maximumf>, %58, %cst_58 [0] : vector<5x4xf32> to vector<4xf32>
    %60 = vector.shape_cast %59 : vector<4xf32> to vector<1x4xf32>
    %c0_59 = arith.constant 0 : index
    %c7 = arith.constant 7 : index
    %c0_60 = arith.constant 0 : index
    %61 = vector.load %arg3[%c0_59, %c7, %c0_60] : memref<1x14x4xf32, #tpu.memory_space<vmem>>, vector<1x1x4xf32>
    %62 = vector.shape_cast %61 : vector<1x1x4xf32> to vector<1x4xf32>
    %63 = vector.shape_cast %60 : vector<1x4xf32> to vector<1x1x4xf32>
    tpu.vector_store %arg3[%c0_59, %c7, %c0_60], %63 {strides = array<i32>} : memref<1x14x4xf32, #tpu.memory_space<vmem>>, vector<1x1x4xf32>,
    %c0_61 = arith.constant 0 : index
    %c5_62 = arith.constant 5 : index
    %c0_63 = arith.constant 0 : index
    %c0_64 = arith.constant 0 : index
    %64 = vector.load %arg2[%c0_61, %c5_62, %c0_63, %c0_64] : memref<1x16x16x4xf32, #tpu.memory_space<vmem>>, vector<1x6x5x4xf32>
    %65 = vector.shape_cast %64 : vector<1x6x5x4xf32> to vector<6x5x4xf32>
    %cst_65 = arith.constant dense<0xFF800000> : vector<5x4xf32>
    %66 = vector.multi_reduction <maximumf>, %65, %cst_65 [0] : vector<6x5x4xf32> to vector<5x4xf32>
    %cst_66 = arith.constant dense<0xFF800000> : vector<4xf32>
    %67 = vector.multi_reduction <maximumf>, %66, %cst_66 [0] : vector<5x4xf32> to vector<4xf32>
    %68 = vector.shape_cast %67 : vector<4xf32> to vector<1x4xf32>
    %c0_67 = arith.constant 0 : index
    %c8_68 = arith.constant 8 : index
    %c0_69 = arith.constant 0 : index
    %69 = vector.load %arg3[%c0_67, %c8_68, %c0_69] : memref<1x14x4xf32, #tpu.memory_space<vmem>>, vector<1x1x4xf32>
    %70 = vector.shape_cast %69 : vector<1x1x4xf32> to vector<1x4xf32>
    %71 = vector.shape_cast %68 : vector<1x4xf32> to vector<1x1x4xf32>
    tpu.vector_store %arg3[%c0_67, %c8_68, %c0_69], %71 {strides = array<i32>} : memref<1x14x4xf32, #tpu.memory_space<vmem>>, vector<1x1x4xf32>,
    %c0_70 = arith.constant 0 : index
    %c5_71 = arith.constant 5 : index
    %c5_72 = arith.constant 5 : index
    %c0_73 = arith.constant 0 : index
    %72 = vector.load %arg2[%c0_70, %c5_71, %c5_72, %c0_73] : memref<1x16x16x4xf32, #tpu.memory_space<vmem>>, vector<1x6x6x4xf32>
    %73 = vector.shape_cast %72 : vector<1x6x6x4xf32> to vector<6x6x4xf32>
    %cst_74 = arith.constant dense<0xFF800000> : vector<6x4xf32>
    %74 = vector.multi_reduction <maximumf>, %73, %cst_74 [0] : vector<6x6x4xf32> to vector<6x4xf32>
    %cst_75 = arith.constant dense<0xFF800000> : vector<4xf32>
    %75 = vector.multi_reduction <maximumf>, %74, %cst_75 [0] : vector<6x4xf32> to vector<4xf32>
    %76 = vector.shape_cast %75 : vector<4xf32> to vector<1x4xf32>
    %c0_76 = arith.constant 0 : index
    %c9 = arith.constant 9 : index
    %c0_77 = arith.constant 0 : index
    %77 = vector.load %arg3[%c0_76, %c9, %c0_77] : memref<1x14x4xf32, #tpu.memory_space<vmem>>, vector<1x1x4xf32>
    %78 = vector.shape_cast %77 : vector<1x1x4xf32> to vector<1x4xf32>
    %79 = vector.shape_cast %76 : vector<1x4xf32> to vector<1x1x4xf32>
    tpu.vector_store %arg3[%c0_76, %c9, %c0_77], %79 {strides = array<i32>} : memref<1x14x4xf32, #tpu.memory_space<vmem>>, vector<1x1x4xf32>,
    %c0_78 = arith.constant 0 : index
    %c5_79 = arith.constant 5 : index
    %c11_80 = arith.constant 11 : index
    %c0_81 = arith.constant 0 : index
    %80 = vector.load %arg2[%c0_78, %c5_79, %c11_80, %c0_81] : memref<1x16x16x4xf32, #tpu.memory_space<vmem>>, vector<1x6x5x4xf32>
    %81 = vector.shape_cast %80 : vector<1x6x5x4xf32> to vector<6x5x4xf32>
    %cst_82 = arith.constant dense<0xFF800000> : vector<5x4xf32>
    %82 = vector.multi_reduction <maximumf>, %81, %cst_82 [0] : vector<6x5x4xf32> to vector<5x4xf32>
    %cst_83 = arith.constant dense<0xFF800000> : vector<4xf32>
    %83 = vector.multi_reduction <maximumf>, %82, %cst_83 [0] : vector<5x4xf32> to vector<4xf32>
    %84 = vector.shape_cast %83 : vector<4xf32> to vector<1x4xf32>
    %c0_84 = arith.constant 0 : index
    %c10 = arith.constant 10 : index
    %c0_85 = arith.constant 0 : index
    %85 = vector.load %arg3[%c0_84, %c10, %c0_85] : memref<1x14x4xf32, #tpu.memory_space<vmem>>, vector<1x1x4xf32>
    %86 = vector.shape_cast %85 : vector<1x1x4xf32> to vector<1x4xf32>
    %87 = vector.shape_cast %84 : vector<1x4xf32> to vector<1x1x4xf32>
    tpu.vector_store %arg3[%c0_84, %c10, %c0_85], %87 {strides = array<i32>} : memref<1x14x4xf32, #tpu.memory_space<vmem>>, vector<1x1x4xf32>,
    %c0_86 = arith.constant 0 : index
    %c11_87 = arith.constant 11 : index
    %c0_88 = arith.constant 0 : index
    %c0_89 = arith.constant 0 : index
    %88 = vector.load %arg2[%c0_86, %c11_87, %c0_88, %c0_89] : memref<1x16x16x4xf32, #tpu.memory_space<vmem>>, vector<1x5x5x4xf32>
    %89 = vector.shape_cast %88 : vector<1x5x5x4xf32> to vector<5x5x4xf32>
    %cst_90 = arith.constant dense<0xFF800000> : vector<5x4xf32>
    %90 = vector.multi_reduction <maximumf>, %89, %cst_90 [0] : vector<5x5x4xf32> to vector<5x4xf32>
    %cst_91 = arith.constant dense<0xFF800000> : vector<4xf32>
    %91 = vector.multi_reduction <maximumf>, %90, %cst_91 [0] : vector<5x4xf32> to vector<4xf32>
    %92 = vector.shape_cast %91 : vector<4xf32> to vector<1x4xf32>
    %c0_92 = arith.constant 0 : index
    %c11_93 = arith.constant 11 : index
    %c0_94 = arith.constant 0 : index
    %93 = vector.load %arg3[%c0_92, %c11_93, %c0_94] : memref<1x14x4xf32, #tpu.memory_space<vmem>>, vector<1x1x4xf32>
    %94 = vector.shape_cast %93 : vector<1x1x4xf32> to vector<1x4xf32>
    %95 = vector.shape_cast %92 : vector<1x4xf32> to vector<1x1x4xf32>
    tpu.vector_store %arg3[%c0_92, %c11_93, %c0_94], %95 {strides = array<i32>} : memref<1x14x4xf32, #tpu.memory_space<vmem>>, vector<1x1x4xf32>,
    %c0_95 = arith.constant 0 : index
    %c11_96 = arith.constant 11 : index
    %c5_97 = arith.constant 5 : index
    %c0_98 = arith.constant 0 : index
    %96 = vector.load %arg2[%c0_95, %c11_96, %c5_97, %c0_98] : memref<1x16x16x4xf32, #tpu.memory_space<vmem>>, vector<1x5x6x4xf32>
    %97 = vector.shape_cast %96 : vector<1x5x6x4xf32> to vector<5x6x4xf32>
    %cst_99 = arith.constant dense<0xFF800000> : vector<6x4xf32>
    %98 = vector.multi_reduction <maximumf>, %97, %cst_99 [0] : vector<5x6x4xf32> to vector<6x4xf32>
    %cst_100 = arith.constant dense<0xFF800000> : vector<4xf32>
    %99 = vector.multi_reduction <maximumf>, %98, %cst_100 [0] : vector<6x4xf32> to vector<4xf32>
    %100 = vector.shape_cast %99 : vector<4xf32> to vector<1x4xf32>
    %c0_101 = arith.constant 0 : index
    %c12 = arith.constant 12 : index
    %c0_102 = arith.constant 0 : index
    %101 = vector.load %arg3[%c0_101, %c12, %c0_102] : memref<1x14x4xf32, #tpu.memory_space<vmem>>, vector<1x1x4xf32>
    %102 = vector.shape_cast %101 : vector<1x1x4xf32> to vector<1x4xf32>
    %103 = vector.shape_cast %100 : vector<1x4xf32> to vector<1x1x4xf32>
    tpu.vector_store %arg3[%c0_101, %c12, %c0_102], %103 {strides = array<i32>} : memref<1x14x4xf32, #tpu.memory_space<vmem>>, vector<1x1x4xf32>,
    %c0_103 = arith.constant 0 : index
    %c11_104 = arith.constant 11 : index
    %c11_105 = arith.constant 11 : index
    %c0_106 = arith.constant 0 : index
    %104 = vector.load %arg2[%c0_103, %c11_104, %c11_105, %c0_106] : memref<1x16x16x4xf32, #tpu.memory_space<vmem>>, vector<1x5x5x4xf32>
    %105 = vector.shape_cast %104 : vector<1x5x5x4xf32> to vector<5x5x4xf32>
    %cst_107 = arith.constant dense<0xFF800000> : vector<5x4xf32>
    %106 = vector.multi_reduction <maximumf>, %105, %cst_107 [0] : vector<5x5x4xf32> to vector<5x4xf32>
    %cst_108 = arith.constant dense<0xFF800000> : vector<4xf32>
    %107 = vector.multi_reduction <maximumf>, %106, %cst_108 [0] : vector<5x4xf32> to vector<4xf32>
    %108 = vector.shape_cast %107 : vector<4xf32> to vector<1x4xf32>
    %c0_109 = arith.constant 0 : index
    %c13 = arith.constant 13 : index
    %c0_110 = arith.constant 0 : index
    %109 = vector.load %arg3[%c0_109, %c13, %c0_110] : memref<1x14x4xf32, #tpu.memory_space<vmem>>, vector<1x1x4xf32>
    %110 = vector.shape_cast %109 : vector<1x1x4xf32> to vector<1x4xf32>
    %111 = vector.shape_cast %108 : vector<1x4xf32> to vector<1x1x4xf32>
    tpu.vector_store %arg3[%c0_109, %c13, %c0_110], %111 {strides = array<i32>} : memref<1x14x4xf32, #tpu.memory_space<vmem>>, vector<1x1x4xf32>,
    return
  }
  func.func @transform_0(%arg0: i32, %arg1: i32) -> (i32, i32, i32, i32) {
    %c0_i32 = arith.constant 0 : i32
    %c0_i32_0 = arith.constant 0 : i32
    %c0_i32_1 = arith.constant 0 : i32
    return %arg0, %c0_i32, %c0_i32_0, %arg1 : i32, i32, i32, i32
  }
  func.func @transform_1(%arg0: i32, %arg1: i32) -> (i32, i32, i32) {
    %c0_i32 = arith.constant 0 : i32
    %c0_i32_0 = arith.constant 0 : i32
    return %arg0, %c0_i32, %arg1 : i32, i32, i32
  }
}

</mosaic_0001>

<llo_original>
// kernel: spp_layer.1
$region0: #{spp_layer.1}
  #allocation0 [shape = 'u32[]', space=smem, size = 0x4, offset = 0x4, fixed_abs, tag = 'smem constant byte address 0x4 - core index']
  #allocation1 [shape = 'u32[72,128]{1,0:T(1,128)}', space=vmem, size = 0x9000, scoped, tag = 'internal scratch']
  %s0 = inlined_call_operand.vmem [shape: f32[2,16,16,4], index: 0, kind: input, shape index: {}]
  %s1 = inlined_call_operand.vmem [shape: f32[2,14,4], index: 1, kind: output, shape index: {}]
  %s2 = sld [smem:[#allocation0]]
  $region37: #{spp_layer.1} parent=0
    _
  %s4 = ssub.s32 1, %s2
  %s5 = scalar_select 0, %s4, %s2
  loop: start=0, step=1, limit=4
  $region2: #{spp_layer.1} parent=0 // loop_pre_header
    _
  $region3: #{spp_layer.1} parent=0 // loop_header
    %s7 = sphi 0, %s11
    %p8 = scmp.ge.s32.totalorder %s7, 4
    %s14 = sphi 0, %s26
    %s15 = sphi 0, %s22
    %s16 = sphi 0, %s14
    %s17 = sphi 0, %s15
    %s18 = sphi 0, %s16
    %s19 = sphi 0, %s17
    %s31 = sphi 0, %s33
    %s34 = sphi 0, %s31
    %s35 = sphi 0, %s34
    %s51 = sphi 0, %s35
    %s59 = sphi 0, %s61
    %s62 = sphi 0, %s59
    %s63 = sphi 0, %s62
    %s79 = sphi 0, %s63
  $region4: #{spp_layer.1} parent=0 // loop_header_branch
    %10 = sbr.rel (%p8) target = $region8
  $region5: #{spp_layer.1} parent=0 // loop_body
    %s12 = ssub.s32 %s7, 1
    %s13 = ssub.s32 %s7, 2
    %s20 = sadd.s32 1, %s15
    %p21 = scmp.ge.s32.totalorder %s20, 1
    %s22 = scalar_select %p21, 0, %s20
    %s23 = sadd.s32 1, %s14
    %s24 = scalar_select %p21, %s23, %s14
    %p25 = scmp.ge.s32.totalorder %s24, 2
    %s26 = scalar_select %p25, 0, %s24
    %s27 = ssub.s32 %s14, %s26
    %s28 = ssub.s32 %s15, %s22
    %s29 = sor.u32 %s27, %s28
    %p30 = scmp.eq.s32.totalorder %s29, 0
    %s32 = sadd.s32 %s31, 1
    %s33 = scalar_select %p30, %s31, %s32
    %p36 = pneg %p30
    %p37 = scmp.eq.s32.totalorder %s7, 1
    %p38 = por %p36, %p37
    %p39 = scmp.ne.s32.totalorder %s31, %s34
    %p40 = scmp.eq.s32.totalorder %s7, 0
    %p41 = por %p39, %p40
    %p42 = scmp.ne.s32.totalorder %s31, %s34
    %p43 = scmp.eq.s32.totalorder %s12, 1
    %p44 = por %p42, %p43
    %p45 = scmp.ne.s32.totalorder %s34, %s35
    %p46 = scmp.eq.s32.totalorder %s12, 0
    %p47 = por %p45, %p46
    %p48 = scmp.ne.s32.totalorder %s34, %s35
    %p49 = scmp.eq.s32.totalorder %s13, 1
    %p50 = por %p48, %p49
    %p52 = scmp.ne.s32.totalorder %s35, %s51
    %p53 = scmp.eq.s32.totalorder %s13, 0
    %p54 = por %p52, %p53
    %s55 = ssub.s32 %s14, %s26
    %s56 = ssub.s32 %s15, %s22
    %s57 = sor.u32 %s55, %s56
    %p58 = scmp.eq.s32.totalorder %s57, 0
    %s60 = sadd.s32 %s59, 1
    %s61 = scalar_select %p58, %s59, %s60
    %p64 = pneg %p58
    %p65 = scmp.eq.s32.totalorder %s7, 1
    %p66 = por %p64, %p65
    %p67 = scmp.ne.s32.totalorder %s59, %s62
    %p68 = scmp.eq.s32.totalorder %s7, 0
    %p69 = por %p67, %p68
    %p70 = scmp.ne.s32.totalorder %s59, %s62
    %p71 = scmp.eq.s32.totalorder %s12, 1
    %p72 = por %p70, %p71
    %p73 = scmp.ne.s32.totalorder %s62, %s63
    %p74 = scmp.eq.s32.totalorder %s12, 0
    %p75 = por %p73, %p74
    %p76 = scmp.ne.s32.totalorder %s62, %s63
    %p77 = scmp.eq.s32.totalorder %s13, 1
    %p78 = por %p76, %p77
    %p80 = scmp.ne.s32.totalorder %s63, %s79
    %p81 = scmp.eq.s32.totalorder %s13, 0
    %p82 = por %p80, %p81
    %p83 = scmp.le.s32.totalorder 1, %s7
    %p84 = scmp.lt.s32.totalorder %s7, 3
    %p85 = pnand %p83, %p84
    %p86 = pneg %p85
    // Predicated region
    $region9: #{spp_layer.1} parent=5 // pred_check
      _
    $region10: #{spp_layer.1} parent=5 // pred_check_branch
      %88 = sbr.rel (%p85) target = $region12
    $region11: #{spp_layer.1} parent=5 // pred_region
      %s89 = ssub.s32 %s7, 1
    $region12: #{spp_layer.1} parent=5 // pred_fallthru
      _
    %p90 = scmp.lt.s32.totalorder %s7, 2
    // Predicated region
    $region13: #{spp_layer.1} parent=5 // pred_check
      %p91 = pneg %p90
    $region14: #{spp_layer.1} parent=5 // pred_check_branch
      %93 = sbr.rel (%p91) target = $region16
    $region15: #{spp_layer.1} parent=5 // pred_region
      // Predicated region
      $region17: #{spp_layer.1} parent=15 // pred_check
        %p94 = pneg %p41
      $region18: #{spp_layer.1} parent=15 // pred_check_branch
        %96 = sbr.rel (%p94) target = $region20
      $region19: #{spp_layer.1} parent=15 // pred_region
        %p97 = scmp.lt.s32.totalorder %s14, 1
        %s98 = scalar_select %p97, %s14, 1
        %p99 = scmp.lt.s32.totalorder %s15, 0
        %s100 = scalar_select %p99, %s15, 0
        %s101 = smul.addr %s98, 32
        %s102 = sadd.s32 %s100, %s101
        %s103 = smul.addr %s102, 8
        %s104 = scalar_lea.vmem %s0, %s103
      $region20: #{spp_layer.1} parent=15 // pred_fallthru
        _
    $region16: #{spp_layer.1} parent=5 // pred_fallthru
      _
    %p105 = scmp.le.s32.totalorder 1, %s7
    %p106 = scmp.lt.s32.totalorder %s7, 3
    %p107 = pnand %p105, %p106
    %p108 = pneg %p107
    // Predicated region
    $region21: #{spp_layer.1} parent=5 // pred_check
      _
    $region22: #{spp_layer.1} parent=5 // pred_check_branch
      %110 = sbr.rel (%p107) target = $region24
    $region23: #{spp_layer.1} parent=5 // pred_region
      %s111 = ssub.s32 %s7, 1
      %p112 = scmp.lt.s32.totalorder %s16, 1
      %s113 = scalar_select %p112, %s16, 1
      %p114 = scmp.lt.s32.totalorder %s17, 0
      %s115 = scalar_select %p114, %s17, 0
      %s116 = smul.addr %s113, 32
      %s117 = sadd.s32 %s115, %s116
      %s118 = smul.addr %s117, 8
      %s119 = scalar_lea.vmem %s0, %s118
      %p120 = pneg %p47
      %p121 = pneg %p44
      %p122 = pneg %p75
      %p123 = pneg %p72
      %p124 = scmp.lt.s32.totalorder %s16, 1
      %s125 = scalar_select %p124, %s16, 1
      %p126 = scmp.lt.s32.totalorder %s17, 0
      %s127 = scalar_select %p126, %s17, 0
      %s128 = smul.addr %s125, 2
      %s129 = sadd.s32 %s127, %s128
      %s130 = smul.addr %s129, 8
      %s131 = scalar_lea.vmem %s1, %s130
      %p132 = scmp.lt.s32.totalorder %s16, 1
      %s133 = scalar_select %p132, %s16, 1
      %p134 = scmp.lt.s32.totalorder %s17, 0
      %s135 = scalar_select %p134, %s17, 0
      %s136 = smul.addr %s133, 32
      %s137 = sadd.s32 %s135, %s136
      %s138 = smul.addr %s137, 8
      %s139 = scalar_lea.vmem %s0, %s138
      %p140 = scmp.lt.s32.totalorder %s16, 1
      %s141 = scalar_select %p140, %s16, 1
      %p142 = scmp.lt.s32.totalorder %s17, 0
      %s143 = scalar_select %p142, %s17, 0
      %s144 = smul.addr %s141, 2
      %s145 = sadd.s32 %s143, %s144
      %s146 = smul.addr %s145, 8
      %s147 = scalar_lea.vmem %s1, %s146
      %v148 = vld [vmem:[%s139] sm:$0xff]
      %v149 = vld [vmem:[%s139 + $0x8] sm:$0xff]
      %v150 = vld [vmem:[%s139 + $0x10] sm:$0xff]
      %v151 = vld [vmem:[%s139 + $0x18] sm:$0xff]
      %v152 = vld [vmem:[%s139 + $0x20] sm:$0xff]
      %v153 = vld [vmem:[%s139 + $0x28] sm:$0xff]
      %v154 = vld [vmem:[%s139 + $0x30] sm:$0xff]
      %v155 = vld [vmem:[%s139 + $0x38] sm:$0xff]
      %v156 = vld [vmem:[%s139 + $0x40] sm:$0xff]
      %v157 = vld [vmem:[%s139 + $0x48] sm:$0xff]
      %v158 = vld [vmem:[%s139 + $0x50] sm:$0xff]
      %v159 = vld [vmem:[%s139 + $0x58] sm:$0xff]
      %v160 = vld [vmem:[%s139 + $0x60] sm:$0xff]
      %v161 = vld [vmem:[%s139 + $0x68] sm:$0xff]
      %v162 = vld [vmem:[%s139 + $0x70] sm:$0xff]
      %v163 = vld [vmem:[%s139 + $0x78] sm:$0xff]
      %v164 = vld [vmem:[%s139 + $0x80] sm:$0xff]
      %v165 = vld [vmem:[%s139 + $0x88] sm:$0xff]
      %v166 = vld [vmem:[%s139 + $0x90] sm:$0xff]
      %v167 = vld [vmem:[%s139 + $0x98] sm:$0xff]
      %v168 = vld [vmem:[%s139 + $0xa0] sm:$0xff]
      %v169 = vld [vmem:[%s139 + $0xa8] sm:$0xff]
      %v170 = vld [vmem:[%s139 + $0xb0] sm:$0xff]
      %v171 = vld [vmem:[%s139 + $0xb8] sm:$0xff]
      %v172 = vld [vmem:[%s139 + $0xc0] sm:$0xff]
      %v173 = vld [vmem:[%s139 + $0xc8] sm:$0xff]
      %v174 = vld [vmem:[%s139 + $0xd0] sm:$0xff]
      %v175 = vld [vmem:[%s139 + $0xd8] sm:$0xff]
      %v176 = vld [vmem:[%s139 + $0xe0] sm:$0xff]
      %v177 = vld [vmem:[%s139 + $0xe8] sm:$0xff]
      %v178 = vld [vmem:[%s139 + $0xf0] sm:$0xff]
      %v179 = vld [vmem:[%s139 + $0xf8] sm:$0xff]
      %vm180 = vcmask 31744
      %v181 = vsel %vm180, %v148, -inf
      %v182 = vsel %vm180, %v150, -inf
      %v183 = vsel %vm180, %v152, -inf
      %v184 = vmax.f32 %v181, %v183
      %v185 = vsel %vm180, %v154, -inf
      %v186 = vmax.f32 %v182, %v185
      %v187 = vsel %vm180, %v156, -inf
      %v188 = vmax.f32 %v184, %v187
      %v189 = vsel %vm180, %v158, -inf
      %v190 = vmax.f32 %v186, %v189
      %v191 = vsel %vm180, %v160, -inf
      %v192 = vmax.f32 %v188, %v191
      %v193 = vsel %vm180, %v162, -inf
      %v194 = vmax.f32 %v190, %v193
      %v195 = vsel %vm180, %v164, -inf
      %v196 = vmax.f32 %v192, %v195
      %v197 = vsel %vm180, %v166, -inf
      %v198 = vmax.f32 %v194, %v197
      %v199 = vsel %vm180, %v168, -inf
      %v200 = vmax.f32 %v196, %v199
      %v201 = vsel %vm180, %v170, -inf
      %v202 = vmax.f32 %v198, %v201
      %v203 = vsel %vm180, %v172, -inf
      %v204 = vmax.f32 %v200, %v203
      %v205 = vsel %vm180, %v174, -inf
      %v206 = vmax.f32 %v202, %v205
      %v207 = vsel %vm180, %v176, -inf
      %v208 = vmax.f32 %v204, %v207
      %v209 = vsel %vm180, %v178, -inf
      %v210 = vmax.f32 %v206, %v209
      %v211 = vmax.f32 %v208, %v210
      %v212 = vsel %vm180, %v149, -inf
      %v213 = vsel %vm180, %v151, -inf
      %v214 = vsel %vm180, %v153, -inf
      %v215 = vmax.f32 %v212, %v214
      %v216 = vsel %vm180, %v155, -inf
      %v217 = vmax.f32 %v213, %v216
      %v218 = vsel %vm180, %v157, -inf
      %v219 = vmax.f32 %v215, %v218
      %v220 = vsel %vm180, %v159, -inf
      %v221 = vmax.f32 %v217, %v220
      %v222 = vsel %vm180, %v161, -inf
      %v223 = vmax.f32 %v219, %v222
      %v224 = vsel %vm180, %v163, -inf
      %v225 = vmax.f32 %v221, %v224
      %v226 = vsel %vm180, %v165, -inf
      %v227 = vmax.f32 %v223, %v226
      %v228 = vsel %vm180, %v167, -inf
      %v229 = vmax.f32 %v225, %v228
      %v230 = vsel %vm180, %v169, -inf
      %v231 = vmax.f32 %v227, %v230
      %v232 = vsel %vm180, %v171, -inf
      %v233 = vmax.f32 %v229, %v232
      %v234 = vsel %vm180, %v173, -inf
      %v235 = vmax.f32 %v231, %v234
      %v236 = vsel %vm180, %v175, -inf
      %v237 = vmax.f32 %v233, %v236
      %v238 = vsel %vm180, %v177, -inf
      %v239 = vmax.f32 %v235, %v238
      %v240 = vsel %vm180, %v179, -inf
      %v241 = vmax.f32 %v237, %v240
      %v242 = vmax.f32 %v239, %v241
      %v243 = vsel %vm180, %v211, -inf
      %v244 = vsel %vm180, %v242, -inf
      %v245 = vmax.f32 %v243, %v244
      %v246 = vrot.slane %v245, 4
      %v247 = vmax.f32 %v245, %v246
      %v248 = vrot.slane %v247, 2
      %v249 = vmax.f32 %v247, %v248
      %v250 = vrot.slane %v249, 1
      %v251 = vmax.f32 %v249, %v250
      %vm252 = vcmask 24576
      %253 = vst.msk [vmem:[%s147] sm:$0x1] %vm252, %v251
      %v254 = vld [vmem:[%s139] sm:$0xff]
      %v255 = vld [vmem:[%s139 + $0x10] sm:$0xff]
      %v256 = vld [vmem:[%s139 + $0x20] sm:$0xff]
      %v257 = vld [vmem:[%s139 + $0x30] sm:$0xff]
      %v258 = vld [vmem:[%s139 + $0x40] sm:$0xff]
      %v259 = vld [vmem:[%s139 + $0x50] sm:$0xff]
      %v260 = vld [vmem:[%s139 + $0x60] sm:$0xff]
      %v261 = vld [vmem:[%s139 + $0x70] sm:$0xff]
      %v262 = vsel %vm180, %v254, -inf
      %v263 = vsel %vm180, %v255, -inf
      %v264 = vsel %vm180, %v256, -inf
      %v265 = vsel %vm180, %v257, -inf
      %v266 = vsel %vm180, %v258, -inf
      %v267 = vmax.f32 %v262, %v266
      %v268 = vsel %vm180, %v259, -inf
      %v269 = vmax.f32 %v263, %v268
      %v270 = vsel %vm180, %v260, -inf
      %v271 = vmax.f32 %v264, %v270
      %v272 = vsel %vm180, %v261, -inf
      %v273 = vmax.f32 %v265, %v272
      %v274 = vmax.f32 %v267, %v269
      %v275 = vmax.f32 %v271, %v273
      %v276 = vmax.f32 %v274, %v275
      %v277 = vsel %vm180, %v276, -inf
      %v278 = vrot.slane %v277, 4
      %v279 = vmax.f32 %v277, %v278
      %v280 = vrot.slane %v279, 2
      %v281 = vmax.f32 %v279, %v280
      %v282 = vrot.slane %v281, 1
      %v283 = vmax.f32 %v281, %v282
      %284 = vst.msk [vmem:[%s147 + $0x1] sm:$0x1] %vm252, %v283
      %v285 = vld [vmem:[%s139 + $0x8] sm:$0xff]
      %v286 = vld [vmem:[%s139 + $0x18] sm:$0xff]
      %v287 = vld [vmem:[%s139 + $0x28] sm:$0xff]
      %v288 = vld [vmem:[%s139 + $0x38] sm:$0xff]
      %v289 = vld [vmem:[%s139 + $0x48] sm:$0xff]
      %v290 = vld [vmem:[%s139 + $0x58] sm:$0xff]
      %v291 = vld [vmem:[%s139 + $0x68] sm:$0xff]
      %v292 = vld [vmem:[%s139 + $0x78] sm:$0xff]
      %v293 = vsel %vm180, %v285, -inf
      %v294 = vsel %vm180, %v286, -inf
      %v295 = vsel %vm180, %v287, -inf
      %v296 = vsel %vm180, %v288, -inf
      %v297 = vsel %vm180, %v289, -inf
      %v298 = vmax.f32 %v293, %v297
      %v299 = vsel %vm180, %v290, -inf
      %v300 = vmax.f32 %v294, %v299
      %v301 = vsel %vm180, %v291, -inf
      %v302 = vmax.f32 %v295, %v301
      %v303 = vsel %vm180, %v292, -inf
      %v304 = vmax.f32 %v296, %v303
      %v305 = vmax.f32 %v298, %v300
      %v306 = vmax.f32 %v302, %v304
      %v307 = vmax.f32 %v305, %v306
      %v308 = vsel %vm180, %v307, -inf
      %v309 = vrot.slane %v308, 4
      %v310 = vmax.f32 %v308, %v309
      %v311 = vrot.slane %v310, 2
      %v312 = vmax.f32 %v310, %v311
      %v313 = vrot.slane %v312, 1
      %v314 = vmax.f32 %v312, %v313
      %315 = vst.msk [vmem:[%s147 + $0x2] sm:$0x1] %vm252, %v314
      %s316 = scalar_lea.vmem %s139, 128
      %v317 = vld [vmem:[%s316] sm:$0xff]
      %v318 = vld [vmem:[%s316 + $0x10] sm:$0xff]
      %v319 = vld [vmem:[%s316 + $0x20] sm:$0xff]
      %v320 = vld [vmem:[%s316 + $0x30] sm:$0xff]
      %v321 = vld [vmem:[%s316 + $0x40] sm:$0xff]
      %v322 = vld [vmem:[%s316 + $0x50] sm:$0xff]
      %v323 = vld [vmem:[%s316 + $0x60] sm:$0xff]
      %v324 = vld [vmem:[%s316 + $0x70] sm:$0xff]
      %v325 = vsel %vm180, %v317, -inf
      %v326 = vsel %vm180, %v318, -inf
      %v327 = vsel %vm180, %v319, -inf
      %v328 = vsel %vm180, %v320, -inf
      %v329 = vsel %vm180, %v321, -inf
      %v330 = vmax.f32 %v325, %v329
      %v331 = vsel %vm180, %v322, -inf
      %v332 = vmax.f32 %v326, %v331
      %v333 = vsel %vm180, %v323, -inf
      %v334 = vmax.f32 %v327, %v333
      %v335 = vsel %vm180, %v324, -inf
      %v336 = vmax.f32 %v328, %v335
      %v337 = vmax.f32 %v330, %v332
      %v338 = vmax.f32 %v334, %v336
      %v339 = vmax.f32 %v337, %v338
      %v340 = vsel %vm180, %v339, -inf
      %v341 = vrot.slane %v340, 4
      %v342 = vmax.f32 %v340, %v341
      %v343 = vrot.slane %v342, 2
      %v344 = vmax.f32 %v342, %v343
      %v345 = vrot.slane %v344, 1
      %v346 = vmax.f32 %v344, %v345
      %347 = vst.msk [vmem:[%s147 + $0x3] sm:$0x1] %vm252, %v346
      %v348 = vld [vmem:[%s316 + $0x8] sm:$0xff]
      %v349 = vld [vmem:[%s316 + $0x18] sm:$0xff]
      %v350 = vld [vmem:[%s316 + $0x28] sm:$0xff]
      %v351 = vld [vmem:[%s316 + $0x38] sm:$0xff]
      %v352 = vld [vmem:[%s316 + $0x48] sm:$0xff]
      %v353 = vld [vmem:[%s316 + $0x58] sm:$0xff]
      %v354 = vld [vmem:[%s316 + $0x68] sm:$0xff]
      %v355 = vld [vmem:[%s316 + $0x78] sm:$0xff]
      %v356 = vsel %vm180, %v348, -inf
      %v357 = vsel %vm180, %v349, -inf
      %v358 = vsel %vm180, %v350, -inf
      %v359 = vsel %vm180, %v351, -inf
      %v360 = vsel %vm180, %v352, -inf
      %v361 = vmax.f32 %v356, %v360
      %v362 = vsel %vm180, %v353, -inf
      %v363 = vmax.f32 %v357, %v362
      %v364 = vsel %vm180, %v354, -inf
      %v365 = vmax.f32 %v358, %v364
      %v366 = vsel %vm180, %v355, -inf
      %v367 = vmax.f32 %v359, %v366
      %v368 = vmax.f32 %v361, %v363
      %v369 = vmax.f32 %v365, %v367
      %v370 = vmax.f32 %v368, %v369
      %v371 = vsel %vm180, %v370, -inf
      %v372 = vrot.slane %v371, 4
      %v373 = vmax.f32 %v371, %v372
      %v374 = vrot.slane %v373, 2
      %v375 = vmax.f32 %v373, %v374
      %v376 = vrot.slane %v375, 1
      %v377 = vmax.f32 %v375, %v376
      %378 = vst.msk [vmem:[%s147 + $0x4] sm:$0x1] %vm252, %v377
      %v379 = vld [vmem:[%s139] sm:$0x1f]
      %v380 = vld [vmem:[%s139 + $0x10] sm:$0x1f]
      %v381 = vld [vmem:[%s139 + $0x20] sm:$0x1f]
      %v382 = vld [vmem:[%s139 + $0x30] sm:$0x1f]
      %v383 = vld [vmem:[%s139 + $0x40] sm:$0x1f]
      %vm384 = vcmask 28672
      %v385 = vsel %vm384, %v379, -inf
      %v386 = vsel %vm384, %v380, -inf
      %v387 = vsel %vm384, %v381, -inf
      %v388 = vsel %vm384, %v382, -inf
      %v389 = vsel %vm384, %v383, -inf
      %v390 = vmax.f32 %v385, %v389
      %v391 = vmax.f32 %v390, %v386
      %v392 = vmax.f32 %v387, %v388
      %v393 = vmax.f32 %v391, %v392
      %v394 = vsel %vm384, %v393, -inf
      %v395 = vrot.slane %v394, 4
      %v396 = vmax.f32 %v394, %v395
      %v397 = vrot.slane %v396, 2
      %v398 = vmax.f32 %v396, %v397
      %v399 = vrot.slane %v398, 1
      %v400 = vmax.f32 %v398, %v399
      %401 = vst.msk [vmem:[%s147 + $0x5] sm:$0x1] %vm252, %v400
      %v402 = vld [vmem:[%s139 + $0x5] sm:$0x3f]
      %v403 = vld [vmem:[%s139 + $0x15] sm:$0x3f]
      %v404 = vld [vmem:[%s139 + $0x25] sm:$0x3f]
      %v405 = vld [vmem:[%s139 + $0x35] sm:$0x3f]
      %v406 = vld [vmem:[%s139 + $0x45] sm:$0x3f]
      %vm407 = vcmask 29696
      %v408 = vsel %vm407, %v402, -inf
      %v409 = vsel %vm407, %v403, -inf
      %v410 = vsel %vm407, %v404, -inf
      %v411 = vsel %vm407, %v405, -inf
      %v412 = vsel %vm407, %v406, -inf
      %v413 = vmax.f32 %v408, %v412
      %v414 = vmax.f32 %v413, %v409
      %v415 = vmax.f32 %v410, %v411
      %v416 = vmax.f32 %v414, %v415
      %v417 = vsel %vm407, %v416, -inf
      %v418 = vrot.slane %v417, 4
      %v419 = vmax.f32 %v417, %v418
      %v420 = vrot.slane %v419, 2
      %v421 = vmax.f32 %v419, %v420
      %v422 = vrot.slane %v421, 1
      %v423 = vmax.f32 %v421, %v422
      %424 = vst.msk [vmem:[%s147 + $0x6] sm:$0x1] %vm252, %v423
      %v425 = vld [vmem:[%s139 + $0xb] sm:$0x1f]
      %v426 = vld [vmem:[%s139 + $0x1b] sm:$0x1f]
      %v427 = vld [vmem:[%s139 + $0x2b] sm:$0x1f]
      %v428 = vld [vmem:[%s139 + $0x3b] sm:$0x1f]
      %v429 = vld [vmem:[%s139 + $0x4b] sm:$0x1f]
      %v430 = vsel %vm384, %v425, -inf
      %v431 = vsel %vm384, %v426, -inf
      %v432 = vsel %vm384, %v427, -inf
      %v433 = vsel %vm384, %v428, -inf
      %v434 = vsel %vm384, %v429, -inf
      %v435 = vmax.f32 %v430, %v434
      %v436 = vmax.f32 %v435, %v431
      %v437 = vmax.f32 %v432, %v433
      %v438 = vmax.f32 %v436, %v437
      %v439 = vsel %vm384, %v438, -inf
      %v440 = vrot.slane %v439, 4
      %v441 = vmax.f32 %v439, %v440
      %v442 = vrot.slane %v441, 2
      %v443 = vmax.f32 %v441, %v442
      %v444 = vrot.slane %v443, 1
      %v445 = vmax.f32 %v443, %v444
      %446 = vst.msk [vmem:[%s147 + $0x7] sm:$0x1] %vm252, %v445
      %s447 = scalar_lea.vmem %s139, 80
      %v448 = vld [vmem:[%s447] sm:$0x1f]
      %v449 = vld [vmem:[%s447 + $0x10] sm:$0x1f]
      %v450 = vld [vmem:[%s447 + $0x20] sm:$0x1f]
      %v451 = vld [vmem:[%s447 + $0x30] sm:$0x1f]
      %v452 = vld [vmem:[%s447 + $0x40] sm:$0x1f]
      %v453 = vld [vmem:[%s447 + $0x50] sm:$0x1f]
      %v454 = vsel %vm384, %v448, -inf
      %v455 = vsel %vm384, %v449, -inf
      %v456 = vsel %vm384, %v450, -inf
      %v457 = vsel %vm384, %v451, -inf
      %v458 = vsel %vm384, %v452, -inf
      %v459 = vmax.f32 %v454, %v458
      %v460 = vsel %vm384, %v453, -inf
      %v461 = vmax.f32 %v455, %v460
      %v462 = vmax.f32 %v459, %v461
      %v463 = vmax.f32 %v456, %v457
      %v464 = vmax.f32 %v462, %v463
      %v465 = vsel %vm384, %v464, -inf
      %v466 = vrot.slane %v465, 4
      %v467 = vmax.f32 %v465, %v466
      %v468 = vrot.slane %v467, 2
      %v469 = vmax.f32 %v467, %v468
      %v470 = vrot.slane %v469, 1
      %v471 = vmax.f32 %v469, %v470
      %472 = vst.msk [vmem:[%s147 + $0x8] sm:$0x1] %vm252, %v471
      %v473 = vld [vmem:[%s447 + $0x5] sm:$0x3f]
      %v474 = vld [vmem:[%s447 + $0x15] sm:$0x3f]
      %v475 = vld [vmem:[%s447 + $0x25] sm:$0x3f]
      %v476 = vld [vmem:[%s447 + $0x35] sm:$0x3f]
      %v477 = vld [vmem:[%s447 + $0x45] sm:$0x3f]
      %v478 = vld [vmem:[%s447 + $0x55] sm:$0x3f]
      %v479 = vsel %vm407, %v473, -inf
      %v480 = vsel %vm407, %v474, -inf
      %v481 = vsel %vm407, %v475, -inf
      %v482 = vsel %vm407, %v476, -inf
      %v483 = vsel %vm407, %v477, -inf
      %v484 = vmax.f32 %v479, %v483
      %v485 = vsel %vm407, %v478, -inf
      %v486 = vmax.f32 %v480, %v485
      %v487 = vmax.f32 %v484, %v486
      %v488 = vmax.f32 %v481, %v482
      %v489 = vmax.f32 %v487, %v488
      %v490 = vsel %vm407, %v489, -inf
      %v491 = vrot.slane %v490, 4
      %v492 = vmax.f32 %v490, %v491
      %v493 = vrot.slane %v492, 2
      %v494 = vmax.f32 %v492, %v493
      %v495 = vrot.slane %v494, 1
      %v496 = vmax.f32 %v494, %v495
      %497 = vst.msk [vmem:[%s147 + $0x9] sm:$0x1] %vm252, %v496
      %v498 = vld [vmem:[%s447 + $0xb] sm:$0x1f]
      %v499 = vld [vmem:[%s447 + $0x1b] sm:$0x1f]
      %v500 = vld [vmem:[%s447 + $0x2b] sm:$0x1f]
      %v501 = vld [vmem:[%s447 + $0x3b] sm:$0x1f]
      %v502 = vld [vmem:[%s447 + $0x4b] sm:$0x1f]
      %v503 = vld [vmem:[%s447 + $0x5b] sm:$0x1f]
      %v504 = vsel %vm384, %v498, -inf
      %v505 = vsel %vm384, %v499, -inf
      %v506 = vsel %vm384, %v500, -inf
      %v507 = vsel %vm384, %v501, -inf
      %v508 = vsel %vm384, %v502, -inf
      %v509 = vmax.f32 %v504, %v508
      %v510 = vsel %vm384, %v503, -inf
      %v511 = vmax.f32 %v505, %v510
      %v512 = vmax.f32 %v509, %v511
      %v513 = vmax.f32 %v506, %v507
      %v514 = vmax.f32 %v512, %v513
      %v515 = vsel %vm384, %v514, -inf
      %v516 = vrot.slane %v515, 4
      %v517 = vmax.f32 %v515, %v516
      %v518 = vrot.slane %v517, 2
      %v519 = vmax.f32 %v517, %v518
      %v520 = vrot.slane %v519, 1
      %v521 = vmax.f32 %v519, %v520
      %522 = vst.msk [vmem:[%s147 + $0xa] sm:$0x1] %vm252, %v521
      %s523 = scalar_lea.vmem %s139, 176
      %v524 = vld [vmem:[%s523] sm:$0x1f]
      %v525 = vld [vmem:[%s523 + $0x10] sm:$0x1f]
      %v526 = vld [vmem:[%s523 + $0x20] sm:$0x1f]
      %v527 = vld [vmem:[%s523 + $0x30] sm:$0x1f]
      %v528 = vld [vmem:[%s523 + $0x40] sm:$0x1f]
      %v529 = vsel %vm384, %v524, -inf
      %v530 = vsel %vm384, %v525, -inf
      %v531 = vsel %vm384, %v526, -inf
      %v532 = vsel %vm384, %v527, -inf
      %v533 = vsel %vm384, %v528, -inf
      %v534 = vmax.f32 %v529, %v533
      %v535 = vmax.f32 %v534, %v530
      %v536 = vmax.f32 %v531, %v532
      %v537 = vmax.f32 %v535, %v536
      %v538 = vsel %vm384, %v537, -inf
      %v539 = vrot.slane %v538, 4
      %v540 = vmax.f32 %v538, %v539
      %v541 = vrot.slane %v540, 2
      %v542 = vmax.f32 %v540, %v541
      %v543 = vrot.slane %v542, 1
      %v544 = vmax.f32 %v542, %v543
      %545 = vst.msk [vmem:[%s147 + $0xb] sm:$0x1] %vm252, %v544
      %v546 = vld [vmem:[%s523 + $0x5] sm:$0x3f]
      %v547 = vld [vmem:[%s523 + $0x15] sm:$0x3f]
      %v548 = vld [vmem:[%s523 + $0x25] sm:$0x3f]
      %v549 = vld [vmem:[%s523 + $0x35] sm:$0x3f]
      %v550 = vld [vmem:[%s523 + $0x45] sm:$0x3f]
      %v551 = vsel %vm407, %v546, -inf
      %v552 = vsel %vm407, %v547, -inf
      %v553 = vsel %vm407, %v548, -inf
      %v554 = vsel %vm407, %v549, -inf
      %v555 = vsel %vm407, %v550, -inf
      %v556 = vmax.f32 %v551, %v555
      %v557 = vmax.f32 %v556, %v552
      %v558 = vmax.f32 %v553, %v554
      %v559 = vmax.f32 %v557, %v558
      %v560 = vsel %vm407, %v559, -inf
      %v561 = vrot.slane %v560, 4
      %v562 = vmax.f32 %v560, %v561
      %v563 = vrot.slane %v562, 2
      %v564 = vmax.f32 %v562, %v563
      %v565 = vrot.slane %v564, 1
      %v566 = vmax.f32 %v564, %v565
      %567 = vst.msk [vmem:[%s147 + $0xc] sm:$0x1] %vm252, %v566
      %v568 = vld [vmem:[%s523 + $0xb] sm:$0x1f]
      %v569 = vld [vmem:[%s523 + $0x1b] sm:$0x1f]
      %v570 = vld [vmem:[%s523 + $0x2b] sm:$0x1f]
      %v571 = vld [vmem:[%s523 + $0x3b] sm:$0x1f]
      %v572 = vld [vmem:[%s523 + $0x4b] sm:$0x1f]
      %v573 = vsel %vm384, %v568, -inf
      %v574 = vsel %vm384, %v569, -inf
      %v575 = vsel %vm384, %v570, -inf
      %v576 = vsel %vm384, %v571, -inf
      %v577 = vsel %vm384, %v572, -inf
      %v578 = vmax.f32 %v573, %v577
      %v579 = vmax.f32 %v578, %v574
      %v580 = vmax.f32 %v575, %v576
      %v581 = vmax.f32 %v579, %v580
      %v582 = vsel %vm384, %v581, -inf
      %v583 = vrot.slane %v582, 4
      %v584 = vmax.f32 %v582, %v583
      %v585 = vrot.slane %v584, 2
      %v586 = vmax.f32 %v584, %v585
      %v587 = vrot.slane %v586, 1
      %v588 = vmax.f32 %v586, %v587
      %589 = vst.msk [vmem:[%s147 + $0xd] sm:$0x1] %vm252, %v588
      %p590 = scmp.lt.s32.totalorder %s16, 1
      %s591 = scalar_select %p590, %s16, 1
      %p592 = scmp.lt.s32.totalorder %s17, 0
      %s593 = scalar_select %p592, %s17, 0
      %s594 = smul.addr %s591, 2
      %s595 = sadd.s32 %s593, %s594
      %s596 = smul.addr %s595, 8
      %s597 = scalar_lea.vmem %s1, %s596
      // Predicated region
      $region25: #{spp_layer.1} parent=23 // pred_check
        %p598 = pneg %p72
      $region26: #{spp_layer.1} parent=23 // pred_check_branch
        %600 = sbr.rel (%p598) target = $region28
      $region27: #{spp_layer.1} parent=23 // pred_region
        _
      $region28: #{spp_layer.1} parent=23 // pred_fallthru
        _
    $region24: #{spp_layer.1} parent=5 // pred_fallthru
      _
    %p601 = scmp.le.s32.totalorder 2, %s7
    // Predicated region
    $region29: #{spp_layer.1} parent=5 // pred_check
      %p602 = pneg %p601
    $region30: #{spp_layer.1} parent=5 // pred_check_branch
      %604 = sbr.rel (%p602) target = $region32
    $region31: #{spp_layer.1} parent=5 // pred_region
      %s605 = ssub.s32 %s7, 2
      // Predicated region
      $region33: #{spp_layer.1} parent=31 // pred_check
        %p606 = pneg %p78
      $region34: #{spp_layer.1} parent=31 // pred_check_branch
        %608 = sbr.rel (%p606) target = $region36
      $region35: #{spp_layer.1} parent=31 // pred_region
        %p609 = scmp.lt.s32.totalorder %s18, 1
        %s610 = scalar_select %p609, %s18, 1
        %p611 = scmp.lt.s32.totalorder %s19, 0
        %s612 = scalar_select %p611, %s19, 0
        %s613 = smul.addr %s610, 2
        %s614 = sadd.s32 %s612, %s613
        %s615 = smul.addr %s614, 8
        %s616 = scalar_lea.vmem %s1, %s615
      $region36: #{spp_layer.1} parent=31 // pred_fallthru
        _
    $region32: #{spp_layer.1} parent=5 // pred_fallthru
      _
  $region6: #{spp_layer.1} parent=0 // loop_footer
    %s11 = sadd.s32 1, %s7
  $region7: #{spp_layer.1} parent=0 // loop_footer_branch
    %6 = sbr.rel target = $region3
  $region8: #{spp_layer.1} parent=0 // loop_exit
    _

</llo_original>
